<compile_context>
chip_gen: v7x
topology: tpu7x:2x2x1
jax: 0.10.0
libtpu: 0.0.40
codegen_flags: <defaults>
</compile_context>

<pallas_src>
import jax
import jax.numpy as jnp
from jax.experimental import pallas as pl
from jax.experimental.pallas import tpu as pltpu


def _round_up(x, m):
    return ((x + m - 1) // m) * m


class CriticLayout:
    """Static packing layout: every weight/bias lives in one f32 slab.

    Sections (8-row aligned): w0, w1x, w1a, w2..w_{L-1}, wout, then one bias
    row per layer. Columns = max(hidden + (output_size,)); unused entries are 0.
    """

    def __init__(self, state_size, action_size, output_size, hidden):
        hidden = tuple(int(h) for h in hidden)
        assert len(hidden) >= 2, "Critic needs at least two hidden layers"
        self.state_size = int(state_size)
        self.action_size = int(action_size)
        self.output_size = int(output_size)
        self.hidden = hidden

        self.sections = {}
        off = 0

        def add(name, rows, cols):
            nonlocal off
            self.sections[name] = (off, rows, cols)
            off += _round_up(rows, 8)

        add("w0", self.state_size, hidden[0])
        add("w1x", hidden[0], hidden[1])
        add("w1a", self.action_size, hidden[1])
        for i in range(2, len(hidden)):
            add(f"w{i}", hidden[i - 1], hidden[i])
        add("wout", hidden[-1], self.output_size)

        self.bias_row = off
        self.n_bias = len(hidden) + 1
        self.rows = off + _round_up(self.n_bias, 8)
        self.cols = max(max(hidden), self.output_size)


def _make_critic_kernel(layout):
    hidden = layout.hidden
    n_hidden = len(hidden)
    sections = layout.sections
    bias_row = layout.bias_row
    out_size = layout.output_size
    # Final matmul width: keep >= 8 columns (extra columns are zero in the
    # slab, tanh(0)=0, sliced off before the store) so the last dot uses the
    # same narrow-N shapes already exercised by the hidden layers.
    op = min(max(out_size, 8), layout.cols)

    def load_w(ref, name, cols=None):
        off, rows, sec_cols = sections[name]
        return ref[off:off + rows, :(sec_cols if cols is None else cols)]

    def load_b(ref, i, cols):
        return ref[bias_row + i:bias_row + i + 1, :cols]

    def kernel(state_ref, action_ref, w_ref, out_ref):
        def dot(a, bb):
            return jnp.dot(a, bb, preferred_element_type=jnp.float32)

        # L0: relu(state @ W0 + b0)
        x = jnp.maximum(
            dot(state_ref[...], load_w(w_ref, "w0")) + load_b(w_ref, 0, hidden[0]),
            0.0)
        # L1: relu(cat([x, action]) @ W1 + b1) == relu(x @ W1x + action @ W1a + b1)
        h = dot(x, load_w(w_ref, "w1x")) + dot(action_ref[...], load_w(w_ref, "w1a"))
        x = jnp.maximum(h + load_b(w_ref, 1, hidden[1]), 0.0)
        # L2..L_{n-1}: relu(x @ Wi + bi)
        for i in range(2, n_hidden):
            x = jnp.maximum(
                dot(x, load_w(w_ref, f"w{i}")) + load_b(w_ref, i, hidden[i]), 0.0)
        # Output layer: tanh(x @ Wout + bout), stored directly as (tb, out_size).
        y = dot(x, load_w(w_ref, "wout", op)) + load_b(w_ref, n_hidden, op)
        out_ref[...] = jnp.tanh(y[:, :out_size])

    return kernel


def _pick_block_rows(batch, block_b):
    """Batch-tile rows: big, multiple of 8, prefer exact divisor of B, >=2 steps."""
    if batch < 16:
        return batch                      # tb == B is a legal (full-dim) block
    cap = max(8, (min(block_b, batch) // 8) * 8)
    if batch <= block_b:
        # Aim for >= 2 grid steps so v7x megacore can shard the batch axis.
        cap = min(cap, _round_up(pl.cdiv(batch, 2), 8))
    for cand in range(cap, 7, -8):        # prefer no ragged last tile
        if batch % cand == 0:
            return cand
    return cap


def critic_forward(state, action, params, *, block_b=2048):
    """Runs the whole Critic MLP in one Pallas call, tiled over the batch."""
    wpk, layout = params
    B, S = state.shape
    A = action.shape[1]
    O = layout.output_size
    assert S == layout.state_size and A == layout.action_size

    tb = _pick_block_rows(B, block_b)
    grid = (pl.cdiv(B, tb),)

    # Streamed VMEM per step: state/action/out tiles, lane-padded to 128,
    # double-buffered. Only raise the scoped-VMEM limit when it would threaten
    # v5e's 16 MiB default (v6e/v7x defaults are 32 MiB).
    streamed = 2 * 3 * tb * 128 * 4
    vmem_limit = None
    if streamed > (12 << 20):
        vmem_limit = min(streamed + (8 << 20), 64 << 20)

    kernel = _make_critic_kernel(layout)
    return pl.pallas_call(
        kernel,
        out_shape=jax.ShapeDtypeStruct((B, O), jnp.float32),
        grid=grid,
        in_specs=[
            pl.BlockSpec((tb, S), lambda i: (i, 0)),
            pl.BlockSpec((tb, A), lambda i: (i, 0)),
            # Constant index_map -> the packed weight slab is DMA'd once and
            # stays resident in VMEM across all grid steps.
            pl.BlockSpec(wpk.shape, lambda i: (0, 0)),
        ],
        out_specs=pl.BlockSpec((tb, O), lambda i: (i, 0)),
        compiler_params=pltpu.CompilerParams(
            dimension_semantics=("parallel",),
            vmem_limit_bytes=vmem_limit),
    )(state, action, wpk)


def init_params(key, state_size, action_size, output_size, hidden=(32, 16, 8)):
    """nn.Linear-style init (uniform +/- 1/sqrt(fan_in)), packed into one slab."""
    hidden = tuple(hidden)
    layout = CriticLayout(state_size, action_size, output_size, hidden)

    in_dims = [state_size, hidden[0] + action_size] + list(hidden[1:-1]) + [hidden[-1]]
    out_dims = list(hidden) + [output_size]

    ws, bs = [], []
    for fan_in, fan_out in zip(in_dims, out_dims):
        key, kw, kb = jax.random.split(key, 3)
        bound = float(fan_in) ** -0.5
        ws.append(jax.random.uniform(kw, (fan_in, fan_out), jnp.float32, -bound, bound))
        bs.append(jax.random.uniform(kb, (fan_out,), jnp.float32, -bound, bound))

    wpk = jnp.zeros((layout.rows, layout.cols), jnp.float32)

    def put(name, mat):
        nonlocal wpk
        off, rows, cols = layout.sections[name]
        wpk = wpk.at[off:off + rows, :cols].set(mat)

    put("w0", ws[0])
    put("w1x", ws[1][:hidden[0], :])
    put("w1a", ws[1][hidden[0]:, :])
    for i in range(2, len(hidden)):
        put(f"w{i}", ws[i])
    put("wout", ws[-1])
    for i, bvec in enumerate(bs):
        wpk = wpk.at[layout.bias_row + i, :bvec.shape[0]].set(bvec)

    return (wpk, layout)


def critic_ref(state, action, params):
    """Pure-JAX reference of the same forward pass (same packed parameters)."""
    wpk, layout = params
    hidden = layout.hidden

    def W(name):
        off, rows, cols = layout.sections[name]
        return wpk[off:off + rows, :cols]

    def b(i, cols):
        return wpk[layout.bias_row + i:layout.bias_row + i + 1, :cols]

    x = jnp.maximum(state @ W("w0") + b(0, hidden[0]), 0.0)
    x = jnp.maximum(x @ W("w1x") + action @ W("w1a") + b(1, hidden[1]), 0.0)
    for i in range(2, len(hidden)):
        x = jnp.maximum(x @ W(f"w{i}") + b(i, hidden[i]), 0.0)
    return jnp.tanh(x @ W("wout") + b(len(hidden), layout.output_size))


if __name__ == "__main__":
    STATE_SIZE, ACTION_SIZE, OUTPUT_SIZE = 24, 4, 2

    key = jax.random.PRNGKey(0)
    k_params, k_s, k_a, k_s2, k_a2, k_s3, k_a3 = jax.random.split(key, 7)

    params = init_params(k_params, STATE_SIZE, ACTION_SIZE, OUTPUT_SIZE)

    # --- small smoke test (B=8, single tile) --------------------------------
    B = 8
    state = jax.random.normal(k_s, (B, STATE_SIZE), jnp.float32)
    action = jax.random.normal(k_a, (B, ACTION_SIZE), jnp.float32)
    out = jax.block_until_ready(critic_forward(state, action, params))
    ref = critic_ref(state, action, params)
    assert out.shape == (B, OUTPUT_SIZE)
    assert jnp.allclose(out, ref, atol=1e-5, rtol=1e-5)

    # --- multi-tile batch: >= 2-step parallel grid (v7x megacore path) ------
    B2 = 1024
    state2 = jax.random.normal(k_s2, (B2, STATE_SIZE), jnp.float32)
    action2 = jax.random.normal(k_a2, (B2, ACTION_SIZE), jnp.float32)
    out2 = jax.block_until_ready(critic_forward(state2, action2, params))
    assert out2.shape == (B2, OUTPUT_SIZE)
    assert jnp.allclose(out2, critic_ref(state2, action2, params),
                        atol=1e-5, rtol=1e-5)

    # --- ragged batch (B has no multiple-of-8 divisor): discarded-row path --
    B3 = 300
    state3 = jax.random.normal(k_s3, (B3, STATE_SIZE), jnp.float32)
    action3 = jax.random.normal(k_a3, (B3, ACTION_SIZE), jnp.float32)
    out3 = jax.block_until_ready(critic_forward(state3, action3, params))
    assert out3.shape == (B3, OUTPUT_SIZE)
    assert jnp.allclose(out3, critic_ref(state3, action3, params),
                        atol=1e-5, rtol=1e-5)

    print("KERNEL_OK")
</pallas_src>

<mosaic_0001>
module attributes {stable_mosaic.version = 11 : i64} {
  func.func @kernel(%arg0: i32, %arg1: memref<8x24xf32, #tpu.memory_space<vmem>>, %arg2: memref<8x4xf32, #tpu.memory_space<vmem>>, %arg3: memref<96x32xf32, #tpu.memory_space<vmem>>, %arg4: memref<8x2xf32, #tpu.memory_space<vmem>>) attributes {dimension_semantics = [#tpu.dimension_semantics<parallel>], iteration_bounds = array<i64: 1>, scalar_prefetch = 0 : i64, scratch_operands = 0 : i64, tpu.core_type = #tpu.core_type<tc>, window_params = [{transform_indices = @transform_0, window_bounds = array<i64: 8, 24>}, {transform_indices = @transform_1, window_bounds = array<i64: 8, 4>}, {pipeline_mode = #tpu.pipeline_mode<synchronous>, transform_indices = @transform_2, window_bounds = array<i64: 96, 32>}, {transform_indices = @transform_3, window_bounds = array<i64: 8, 2>}]} {
    %c0 = arith.constant 0 : index
    %c0_0 = arith.constant 0 : index
    %0 = vector.load %arg1[%c0, %c0_0] : memref<8x24xf32, #tpu.memory_space<vmem>>, vector<8x24xf32>
    %c0_1 = arith.constant 0 : index
    %c0_2 = arith.constant 0 : index
    %1 = vector.load %arg3[%c0_1, %c0_2] : memref<96x32xf32, #tpu.memory_space<vmem>>, vector<24x32xf32>
    %cst = arith.constant dense<0.000000e+00> : vector<8x32xf32>
    %2 = tpu.matmul %0, %1, %cst {dimension_numbers = #tpu.dot_dimension_numbers<[1], [0], [0], [1], [0, 0, 1, 1], [], []>} : vector<8x24xf32>, vector<24x32xf32>, vector<8x32xf32> -> vector<8x32xf32>
    %c88 = arith.constant 88 : index
    %c0_3 = arith.constant 0 : index
    %3 = vector.load %arg3[%c88, %c0_3] : memref<96x32xf32, #tpu.memory_space<vmem>>, vector<1x32xf32>
    %4 = vector.broadcast %3 : vector<1x32xf32> to vector<8x32xf32>
    %5 = arith.addf %2, %4 : vector<8x32xf32>
    %cst_4 = arith.constant 0.000000e+00 : f32
    %6 = vector.broadcast %cst_4 : f32 to vector<8x32xf32>
    %7 = arith.maximumf %5, %6 : vector<8x32xf32>
    %c24 = arith.constant 24 : index
    %c0_5 = arith.constant 0 : index
    %8 = vector.load %arg3[%c24, %c0_5] : memref<96x32xf32, #tpu.memory_space<vmem>>, vector<32x16xf32>
    %cst_6 = arith.constant dense<0.000000e+00> : vector<8x16xf32>
    %9 = tpu.matmul %7, %8, %cst_6 {dimension_numbers = #tpu.dot_dimension_numbers<[1], [0], [0], [1], [0, 0, 1, 1], [], []>} : vector<8x32xf32>, vector<32x16xf32>, vector<8x16xf32> -> vector<8x16xf32>
    %c0_7 = arith.constant 0 : index
    %c0_8 = arith.constant 0 : index
    %10 = vector.load %arg2[%c0_7, %c0_8] : memref<8x4xf32, #tpu.memory_space<vmem>>, vector<8x4xf32>
    %c56 = arith.constant 56 : index
    %c0_9 = arith.constant 0 : index
    %11 = vector.load %arg3[%c56, %c0_9] : memref<96x32xf32, #tpu.memory_space<vmem>>, vector<4x16xf32>
    %cst_10 = arith.constant dense<0.000000e+00> : vector<8x16xf32>
    %12 = tpu.matmul %10, %11, %cst_10 {dimension_numbers = #tpu.dot_dimension_numbers<[1], [0], [0], [1], [0, 0, 1, 1], [], []>} : vector<8x4xf32>, vector<4x16xf32>, vector<8x16xf32> -> vector<8x16xf32>
    %13 = arith.addf %9, %12 : vector<8x16xf32>
    %c89 = arith.constant 89 : index
    %c0_11 = arith.constant 0 : index
    %14 = vector.load %arg3[%c89, %c0_11] : memref<96x32xf32, #tpu.memory_space<vmem>>, vector<1x16xf32>
    %15 = vector.broadcast %14 : vector<1x16xf32> to vector<8x16xf32>
    %16 = arith.addf %13, %15 : vector<8x16xf32>
    %cst_12 = arith.constant 0.000000e+00 : f32
    %17 = vector.broadcast %cst_12 : f32 to vector<8x16xf32>
    %18 = arith.maximumf %16, %17 : vector<8x16xf32>
    %c64 = arith.constant 64 : index
    %c0_13 = arith.constant 0 : index
    %19 = vector.load %arg3[%c64, %c0_13] : memref<96x32xf32, #tpu.memory_space<vmem>>, vector<16x8xf32>
    %cst_14 = arith.constant dense<0.000000e+00> : vector<8x8xf32>
    %20 = tpu.matmul %18, %19, %cst_14 {dimension_numbers = #tpu.dot_dimension_numbers<[1], [0], [0], [1], [0, 0, 1, 1], [], []>} : vector<8x16xf32>, vector<16x8xf32>, vector<8x8xf32> -> vector<8x8xf32>
    %c90 = arith.constant 90 : index
    %c0_15 = arith.constant 0 : index
    %21 = vector.load %arg3[%c90, %c0_15] : memref<96x32xf32, #tpu.memory_space<vmem>>, vector<1x8xf32>
    %22 = vector.broadcast %21 : vector<1x8xf32> to vector<8x8xf32>
    %23 = arith.addf %20, %22 : vector<8x8xf32>
    %cst_16 = arith.constant 0.000000e+00 : f32
    %24 = vector.broadcast %cst_16 : f32 to vector<8x8xf32>
    %25 = arith.maximumf %23, %24 : vector<8x8xf32>
    %c80 = arith.constant 80 : index
    %c0_17 = arith.constant 0 : index
    %26 = vector.load %arg3[%c80, %c0_17] : memref<96x32xf32, #tpu.memory_space<vmem>>, vector<8x8xf32>
    %cst_18 = arith.constant dense<0.000000e+00> : vector<8x8xf32>
    %27 = tpu.matmul %25, %26, %cst_18 {dimension_numbers = #tpu.dot_dimension_numbers<[1], [0], [0], [1], [0, 0, 1, 1], [], []>} : vector<8x8xf32>, vector<8x8xf32>, vector<8x8xf32> -> vector<8x8xf32>
    %c91 = arith.constant 91 : index
    %c0_19 = arith.constant 0 : index
    %28 = vector.load %arg3[%c91, %c0_19] : memref<96x32xf32, #tpu.memory_space<vmem>>, vector<1x8xf32>
    %29 = vector.broadcast %28 : vector<1x8xf32> to vector<8x8xf32>
    %30 = arith.addf %27, %29 : vector<8x8xf32>
    %31 = vector.extract_strided_slice %30 {offsets = [0, 0], sizes = [8, 2], strides = [1, 1]} : vector<8x8xf32> to vector<8x2xf32>
    %32 = math.tanh %31 : vector<8x2xf32>
    %c0_20 = arith.constant 0 : index
    %c0_21 = arith.constant 0 : index
    %33 = vector.load %arg4[%c0_20, %c0_21] : memref<8x2xf32, #tpu.memory_space<vmem>>, vector<8x2xf32>
    tpu.vector_store %arg4[%c0_20, %c0_21], %32 {strides = array<i32>} : memref<8x2xf32, #tpu.memory_space<vmem>>, vector<8x2xf32>,
    return
  }
  func.func @transform_0(%arg0: i32) -> (i32, i32) {
    %c0_i32 = arith.constant 0 : i32
    %c0_i32_0 = arith.constant 0 : i32
    return %arg0, %c0_i32 : i32, i32
  }
  func.func @transform_1(%arg0: i32) -> (i32, i32) {
    %c0_i32 = arith.constant 0 : i32
    %c0_i32_0 = arith.constant 0 : i32
    return %arg0, %c0_i32 : i32, i32
  }
  func.func @transform_2(%arg0: i32) -> (i32, i32) {
    %c0_i32 = arith.constant 0 : i32
    %c0_i32_0 = arith.constant 0 : i32
    %c0_i32_1 = arith.constant 0 : i32
    return %c0_i32, %c0_i32_0 : i32, i32
  }
  func.func @transform_3(%arg0: i32) -> (i32, i32) {
    %c0_i32 = arith.constant 0 : i32
    %c0_i32_0 = arith.constant 0 : i32
    return %arg0, %c0_i32 : i32, i32
  }
}

</mosaic_0001>

<llo_original>
// kernel: tpu_custom_call.1
$region0: #{tpu_custom_call.1}
  #allocation0 [shape = 'u32[]', space=smem, size = 0x4, offset = 0x4, fixed_abs, tag = 'smem constant byte address 0x4 - core index']
  #allocation1 [shape = 'u32[144,128]{1,0:T(1,128)}', space=vmem, size = 0x12000, scoped, tag = 'internal scratch']
  %s0 = inlined_call_operand.vmem [shape: f32[8,24], index: 0, kind: input, shape index: {}]
  %s1 = inlined_call_operand.vmem [shape: f32[8,4], index: 1, kind: input, shape index: {}]
  %s2 = inlined_call_operand.vmem [shape: f32[96,32], index: 2, kind: input, shape index: {}]
  %s3 = inlined_call_operand.vmem [shape: f32[8,2], index: 3, kind: output, shape index: {}]
  %s4 = sld [smem:[#allocation0]]
  $region22: #{tpu_custom_call.1} parent=0
    _
  %s6 = ssub.s32 1, %s4
  %s7 = scalar_select 0, %s6, %s4
  // Predicated region
  $region2: #{tpu_custom_call.1} parent=0 // pred_check
    _
  $region3: #{tpu_custom_call.1} parent=0 // pred_check_branch
    %9 = sbr.rel (0) target = $region5
  $region4: #{tpu_custom_call.1} parent=0 // pred_region
    _
  $region5: #{tpu_custom_call.1} parent=0 // pred_fallthru
    _
  // Predicated region
  $region6: #{tpu_custom_call.1} parent=0 // pred_check
    _
  $region7: #{tpu_custom_call.1} parent=0 // pred_check_branch
    %11 = sbr.rel (0) target = $region9
  $region8: #{tpu_custom_call.1} parent=0 // pred_region
    _
  $region9: #{tpu_custom_call.1} parent=0 // pred_fallthru
    _
  // Predicated region
  $region10: #{tpu_custom_call.1} parent=0 // pred_check
    _
  $region11: #{tpu_custom_call.1} parent=0 // pred_check_branch
    %13 = sbr.rel (0) target = $region13
  $region12: #{tpu_custom_call.1} parent=0 // pred_region
    _
  $region13: #{tpu_custom_call.1} parent=0 // pred_fallthru
    _
  %v14 = vld [vmem:[%s0] sm:$0xff]
  %v15 = vld [vmem:[%s2] sm:$0xff]
  %v16 = vld [vmem:[%s2 + $0x8] sm:$0xff]
  %v17 = vld [vmem:[%s2 + $0x10] sm:$0xff]
  %v18 = vld [vmem:[%s2 + $0x58] sm:$0x1]
  %v19 = vlaneseq
  %v20 = vshrl.u32 %v19, 7
  %v21 = vsub.s32 0, %v20
  %v22 = vrot.slane %v18, %v21
  %vm23 = vcmask 195584
  %v25 = vsel %vm23, %v14, 0
  %27 = vmatprep.subr.mxu0 0.0
  %28 = vmatpush1.msra.mxu0 %v15
  %29 = vmatprep.subr.mxu0 0.0
  %30 = vmatpush1.msra.mxu0 %v16
  %31 = vmatprep.subr.mxu0 0.0
  %32 = vmatpush1.msra.mxu0 %v17
  %33 = vmatprep.subr.mxu0 0.0
  %34 = vmatpush1.msra.mxu0 0.0
  %35 = vmatprep.subr.mxu0 0.0
  %36 = vmatpush1.msra.mxu0 0.0
  %37 = vmatprep.subr.mxu0 0.0
  %38 = vmatpush1.msra.mxu0 0.0
  %39 = vmatprep.subr.mxu0 0.0
  %40 = vmatpush1.msra.mxu0 0.0
  %41 = vmatprep.subr.mxu0 0.0
  %42 = vmatpush1.msra.mxu0 0.0
  %43 = vmatprep.subr.mxu0 0.0
  %44 = vmatpush1.msra.mxu0 0.0
  %45 = vmatprep.subr.mxu0 0.0
  %46 = vmatpush1.msra.mxu0 0.0
  %47 = vmatprep.subr.mxu0 0.0
  %48 = vmatpush1.msra.mxu0 0.0
  %49 = vmatprep.subr.mxu0 0.0
  %50 = vmatpush1.msra.mxu0 0.0
  %51 = vmatprep.subr.mxu0 0.0
  %52 = vmatpush1.msra.mxu0 0.0
  %53 = vmatprep.subr.mxu0 0.0
  %54 = vmatpush1.msra.mxu0 0.0
  %55 = vmatprep.subr.mxu0 0.0
  %56 = vmatpush1.msra.mxu0 0.0
  %57 = vmatprep.subr.mxu0 0.0
  %58 = vmatpush1.msra.mxu0 0.0
  %59 = vmatprep.subr.mxu0 0.0
  %60 = vmatpush1.msra.mxu0 0.0
  %61 = vmatprep.subr.mxu0 0.0
  %62 = vmatpush1.msra.mxu0 0.0
  %63 = vmatprep.subr.mxu0 0.0
  %64 = vmatpush1.msra.mxu0 0.0
  %65 = vmatprep.subr.mxu0 0.0
  %66 = vmatpush1.msra.mxu0 0.0
  %67 = vmatprep.subr.mxu0 0.0
  %68 = vmatpush1.msra.mxu0 0.0
  %69 = vmatprep.subr.mxu0 0.0
  %70 = vmatpush1.msra.mxu0 0.0
  %71 = vmatprep.subr.mxu0 0.0
  %72 = vmatpush1.msra.mxu0 0.0
  %73 = vmatprep.subr.mxu0 0.0
  %74 = vmatpush1.msra.mxu0 0.0
  %75 = vmatprep.subr.mxu0 0.0
  %76 = vmatpush1.msra.mxu0 0.0
  %77 = vmatprep.subr.mxu0 0.0
  %78 = vmatpush1.msra.mxu0 0.0
  %79 = vmatprep.subr.mxu0 0.0
  %80 = vmatpush1.msra.mxu0 0.0
  %81 = vmatprep.subr.mxu0 0.0
  %82 = vmatpush1.msra.mxu0 0.0
  %83 = vmatprep.subr.mxu0 0.0
  %84 = vmatpush1.msra.mxu0 0.0
  %85 = vmatprep.subr.mxu0 0.0
  %86 = vmatpush1.msra.mxu0 0.0
  %87 = vmatprep.subr.mxu0 0.0
  %88 = vmatpush1.msra.mxu0 0.0
  %89 = vmatprep.subr.mxu0 0.0
  %90 = vmatpush1.msra.mxu0 0.0
  %91 = vmatprep.mubr.f32.mxu0 0.0
  %92 = vmatmul.mubr.f32.gmra.mrb[0].mxu0 %v25
  %v93 = vpop.f32.mrb[0].mxu0
  %v94 = vadd.f32 %v22, %v93
  %v95 = vpop.f32.mrb[0].mxu0
  %96 = vdwg.mxu0
  %v97 = vmax.f32 %v94, 0.0
  %v98 = vld [vmem:[%s2 + $0x18] sm:$0xff]
  %v99 = vld [vmem:[%s2 + $0x20] sm:$0xff]
  %v100 = vld [vmem:[%s2 + $0x28] sm:$0xff]
  %v101 = vld [vmem:[%s2 + $0x30] sm:$0xff]
  %v102 = vld [vmem:[%s1] sm:$0xff]
  %v103 = vld [vmem:[%s2 + $0x38] sm:$0xf]
  %vm104 = vcmask 31744
  %v106 = vsel %vm104, %v102, 0
  %vm108 = vcmask 1043456
  %v110 = vsel %vm108, %v103, 0
  %112 = vmatprep.subr.mxu0 0.0
  %113 = vmatpush1.msra.mxu0 %v110
  %114 = vmatprep.subr.mxu0 0.0
  %115 = vmatpush1.msra.mxu0 0.0
  %116 = vmatprep.subr.mxu0 0.0
  %117 = vmatpush1.msra.mxu0 0.0
  %118 = vmatprep.subr.mxu0 0.0
  %119 = vmatpush1.msra.mxu0 0.0
  %120 = vmatprep.subr.mxu0 0.0
  %121 = vmatpush1.msra.mxu0 0.0
  %122 = vmatprep.subr.mxu0 0.0
  %123 = vmatpush1.msra.mxu0 0.0
  %124 = vmatprep.subr.mxu0 0.0
  %125 = vmatpush1.msra.mxu0 0.0
  %126 = vmatprep.subr.mxu0 0.0
  %127 = vmatpush1.msra.mxu0 0.0
  %128 = vmatprep.subr.mxu0 0.0
  %129 = vmatpush1.msra.mxu0 0.0
  %130 = vmatprep.subr.mxu0 0.0
  %131 = vmatpush1.msra.mxu0 0.0
  %132 = vmatprep.subr.mxu0 0.0
  %133 = vmatpush1.msra.mxu0 0.0
  %134 = vmatprep.subr.mxu0 0.0
  %135 = vmatpush1.msra.mxu0 0.0
  %136 = vmatprep.subr.mxu0 0.0
  %137 = vmatpush1.msra.mxu0 0.0
  %138 = vmatprep.subr.mxu0 0.0
  %139 = vmatpush1.msra.mxu0 0.0
  %140 = vmatprep.subr.mxu0 0.0
  %141 = vmatpush1.msra.mxu0 0.0
  %142 = vmatprep.subr.mxu0 0.0
  %143 = vmatpush1.msra.mxu0 0.0
  %144 = vmatprep.subr.mxu0 0.0
  %145 = vmatpush1.msra.mxu0 0.0
  %146 = vmatprep.subr.mxu0 0.0
  %147 = vmatpush1.msra.mxu0 0.0
  %148 = vmatprep.subr.mxu0 0.0
  %149 = vmatpush1.msra.mxu0 0.0
  %150 = vmatprep.subr.mxu0 0.0
  %151 = vmatpush1.msra.mxu0 0.0
  %152 = vmatprep.subr.mxu0 0.0
  %153 = vmatpush1.msra.mxu0 0.0
  %154 = vmatprep.subr.mxu0 0.0
  %155 = vmatpush1.msra.mxu0 0.0
  %156 = vmatprep.subr.mxu0 0.0
  %157 = vmatpush1.msra.mxu0 0.0
  %158 = vmatprep.subr.mxu0 0.0
  %159 = vmatpush1.msra.mxu0 0.0
  %160 = vmatprep.subr.mxu0 0.0
  %161 = vmatpush1.msra.mxu0 0.0
  %162 = vmatprep.subr.mxu0 0.0
  %163 = vmatpush1.msra.mxu0 0.0
  %164 = vmatprep.subr.mxu0 0.0
  %165 = vmatpush1.msra.mxu0 0.0
  %166 = vmatprep.subr.mxu0 0.0
  %167 = vmatpush1.msra.mxu0 0.0
  %168 = vmatprep.subr.mxu0 0.0
  %169 = vmatpush1.msra.mxu0 0.0
  %170 = vmatprep.subr.mxu0 0.0
  %171 = vmatpush1.msra.mxu0 0.0
  %172 = vmatprep.subr.mxu0 0.0
  %173 = vmatpush1.msra.mxu0 0.0
  %174 = vmatprep.subr.mxu0 0.0
  %175 = vmatpush1.msra.mxu0 0.0
  %176 = vmatprep.mubr.f32.mxu0 0.0
  %177 = vmatmul.mubr.f32.gmra.mrb[0].mxu0 %v106
  %v178 = vpop.f32.mrb[0].mxu0
  %v179 = vadd.f32 0.0, %v178
  %v180 = vpop.f32.mrb[0].mxu0
  %181 = vdwg.mxu0
  %vm182 = vcmask 261120
  %v184 = vsel %vm182, %v97, 0
  %186 = vmatprep.subr.mxu0 0.0
  %187 = vmatpush1.msra.mxu0 %v98
  %188 = vmatprep.subr.mxu0 0.0
  %189 = vmatpush1.msra.mxu0 %v99
  %190 = vmatprep.subr.mxu0 0.0
  %191 = vmatpush1.msra.mxu0 %v100
  %192 = vmatprep.subr.mxu0 0.0
  %193 = vmatpush1.msra.mxu0 %v101
  %194 = vmatprep.subr.mxu0 0.0
  %195 = vmatpush1.msra.mxu0 0.0
  %196 = vmatprep.subr.mxu0 0.0
  %197 = vmatpush1.msra.mxu0 0.0
  %198 = vmatprep.subr.mxu0 0.0
  %199 = vmatpush1.msra.mxu0 0.0
  %200 = vmatprep.subr.mxu0 0.0
  %201 = vmatpush1.msra.mxu0 0.0
  %202 = vmatprep.subr.mxu0 0.0
  %203 = vmatpush1.msra.mxu0 0.0
  %204 = vmatprep.subr.mxu0 0.0
  %205 = vmatpush1.msra.mxu0 0.0
  %206 = vmatprep.subr.mxu0 0.0
  %207 = vmatpush1.msra.mxu0 0.0
  %208 = vmatprep.subr.mxu0 0.0
  %209 = vmatpush1.msra.mxu0 0.0
  %210 = vmatprep.subr.mxu0 0.0
  %211 = vmatpush1.msra.mxu0 0.0
  %212 = vmatprep.subr.mxu0 0.0
  %213 = vmatpush1.msra.mxu0 0.0
  %214 = vmatprep.subr.mxu0 0.0
  %215 = vmatpush1.msra.mxu0 0.0
  %216 = vmatprep.subr.mxu0 0.0
  %217 = vmatpush1.msra.mxu0 0.0
  %218 = vmatprep.subr.mxu0 0.0
  %219 = vmatpush1.msra.mxu0 0.0
  %220 = vmatprep.subr.mxu0 0.0
  %221 = vmatpush1.msra.mxu0 0.0
  %222 = vmatprep.subr.mxu0 0.0
  %223 = vmatpush1.msra.mxu0 0.0
  %224 = vmatprep.subr.mxu0 0.0
  %225 = vmatpush1.msra.mxu0 0.0
  %226 = vmatprep.subr.mxu0 0.0
  %227 = vmatpush1.msra.mxu0 0.0
  %228 = vmatprep.subr.mxu0 0.0
  %229 = vmatpush1.msra.mxu0 0.0
  %230 = vmatprep.subr.mxu0 0.0
  %231 = vmatpush1.msra.mxu0 0.0
  %232 = vmatprep.subr.mxu0 0.0
  %233 = vmatpush1.msra.mxu0 0.0
  %234 = vmatprep.subr.mxu0 0.0
  %235 = vmatpush1.msra.mxu0 0.0
  %236 = vmatprep.subr.mxu0 0.0
  %237 = vmatpush1.msra.mxu0 0.0
  %238 = vmatprep.subr.mxu0 0.0
  %239 = vmatpush1.msra.mxu0 0.0
  %240 = vmatprep.subr.mxu0 0.0
  %241 = vmatpush1.msra.mxu0 0.0
  %242 = vmatprep.subr.mxu0 0.0
  %243 = vmatpush1.msra.mxu0 0.0
  %244 = vmatprep.subr.mxu0 0.0
  %245 = vmatpush1.msra.mxu0 0.0
  %246 = vmatprep.subr.mxu0 0.0
  %247 = vmatpush1.msra.mxu0 0.0
  %248 = vmatprep.subr.mxu0 0.0
  %249 = vmatpush1.msra.mxu0 0.0
  %250 = vmatprep.mubr.f32.mxu0 0.0
  %251 = vmatmul.mubr.f32.gmra.mrb[0].mxu0 %v184
  %v252 = vpop.f32.mrb[0].mxu0
  %v253 = vadd.f32 %v179, %v252
  %v254 = vpop.f32.mrb[0].mxu0
  %255 = vdwg.mxu0
  %v256 = vld [vmem:[%s2 + $0x59] sm:$0x1]
  %v257 = vlaneseq
  %v258 = vshrl.u32 %v257, 7
  %v259 = vsub.s32 0, %v258
  %v260 = vrot.slane %v256, %v259
  %v261 = vadd.f32 %v253, %v260
  %v262 = vmax.f32 %v261, 0.0
  %v263 = vld [vmem:[%s2 + $0x40] sm:$0xff]
  %v264 = vld [vmem:[%s2 + $0x48] sm:$0xff]
  %v265 = vld [vmem:[%s2 + $0x5a] sm:$0x1]
  %v266 = vlaneseq
  %v267 = vshrl.u32 %v266, 7
  %v268 = vsub.s32 0, %v267
  %v269 = vrot.slane %v265, %v268
  %vm270 = vcmask 130048
  %v272 = vsel %vm270, %v262, 0
  %274 = vmatprep.subr.mxu0 0.0
  %275 = vmatpush1.msra.mxu0 %v263
  %276 = vmatprep.subr.mxu0 0.0
  %277 = vmatpush1.msra.mxu0 %v264
  %278 = vmatprep.subr.mxu0 0.0
  %279 = vmatpush1.msra.mxu0 0.0
  %280 = vmatprep.subr.mxu0 0.0
  %281 = vmatpush1.msra.mxu0 0.0
  %282 = vmatprep.subr.mxu0 0.0
  %283 = vmatpush1.msra.mxu0 0.0
  %284 = vmatprep.subr.mxu0 0.0
  %285 = vmatpush1.msra.mxu0 0.0
  %286 = vmatprep.subr.mxu0 0.0
  %287 = vmatpush1.msra.mxu0 0.0
  %288 = vmatprep.subr.mxu0 0.0
  %289 = vmatpush1.msra.mxu0 0.0
  %290 = vmatprep.subr.mxu0 0.0
  %291 = vmatpush1.msra.mxu0 0.0
  %292 = vmatprep.subr.mxu0 0.0
  %293 = vmatpush1.msra.mxu0 0.0
  %294 = vmatprep.subr.mxu0 0.0
  %295 = vmatpush1.msra.mxu0 0.0
  %296 = vmatprep.subr.mxu0 0.0
  %297 = vmatpush1.msra.mxu0 0.0
  %298 = vmatprep.subr.mxu0 0.0
  %299 = vmatpush1.msra.mxu0 0.0
  %300 = vmatprep.subr.mxu0 0.0
  %301 = vmatpush1.msra.mxu0 0.0
  %302 = vmatprep.subr.mxu0 0.0
  %303 = vmatpush1.msra.mxu0 0.0
  %304 = vmatprep.subr.mxu0 0.0
  %305 = vmatpush1.msra.mxu0 0.0
  %306 = vmatprep.subr.mxu0 0.0
  %307 = vmatpush1.msra.mxu0 0.0
  %308 = vmatprep.subr.mxu0 0.0
  %309 = vmatpush1.msra.mxu0 0.0
  %310 = vmatprep.subr.mxu0 0.0
  %311 = vmatpush1.msra.mxu0 0.0
  %312 = vmatprep.subr.mxu0 0.0
  %313 = vmatpush1.msra.mxu0 0.0
  %314 = vmatprep.subr.mxu0 0.0
  %315 = vmatpush1.msra.mxu0 0.0
  %316 = vmatprep.subr.mxu0 0.0
  %317 = vmatpush1.msra.mxu0 0.0
  %318 = vmatprep.subr.mxu0 0.0
  %319 = vmatpush1.msra.mxu0 0.0
  %320 = vmatprep.subr.mxu0 0.0
  %321 = vmatpush1.msra.mxu0 0.0
  %322 = vmatprep.subr.mxu0 0.0
  %323 = vmatpush1.msra.mxu0 0.0
  %324 = vmatprep.subr.mxu0 0.0
  %325 = vmatpush1.msra.mxu0 0.0
  %326 = vmatprep.subr.mxu0 0.0
  %327 = vmatpush1.msra.mxu0 0.0
  %328 = vmatprep.subr.mxu0 0.0
  %329 = vmatpush1.msra.mxu0 0.0
  %330 = vmatprep.subr.mxu0 0.0
  %331 = vmatpush1.msra.mxu0 0.0
  %332 = vmatprep.subr.mxu0 0.0
  %333 = vmatpush1.msra.mxu0 0.0
  %334 = vmatprep.subr.mxu0 0.0
  %335 = vmatpush1.msra.mxu0 0.0
  %336 = vmatprep.subr.mxu0 0.0
  %337 = vmatpush1.msra.mxu0 0.0
  %338 = vmatprep.mubr.f32.mxu0 0.0
  %339 = vmatmul.mubr.f32.gmra.mrb[0].mxu0 %v272
  %v340 = vpop.f32.mrb[0].mxu0
  %v341 = vadd.f32 %v269, %v340
  %v342 = vpop.f32.mrb[0].mxu0
  %343 = vdwg.mxu0
  %v344 = vmax.f32 %v341, 0.0
  %v345 = vld [vmem:[%s2 + $0x50] sm:$0xff]
  %v346 = vld [vmem:[%s2 + $0x5b] sm:$0x1]
  %v347 = vlaneseq
  %v348 = vshrl.u32 %v347, 7
  %v349 = vsub.s32 0, %v348
  %v350 = vrot.slane %v346, %v349
  %vm351 = vcmask 64512
  %v353 = vsel %vm351, %v344, 0
  %355 = vmatprep.subr.mxu0 0.0
  %356 = vmatpush1.msra.mxu0 %v345
  %357 = vmatprep.subr.mxu0 0.0
  %358 = vmatpush1.msra.mxu0 0.0
  %359 = vmatprep.subr.mxu0 0.0
  %360 = vmatpush1.msra.mxu0 0.0
  %361 = vmatprep.subr.mxu0 0.0
  %362 = vmatpush1.msra.mxu0 0.0
  %363 = vmatprep.subr.mxu0 0.0
  %364 = vmatpush1.msra.mxu0 0.0
  %365 = vmatprep.subr.mxu0 0.0
  %366 = vmatpush1.msra.mxu0 0.0
  %367 = vmatprep.subr.mxu0 0.0
  %368 = vmatpush1.msra.mxu0 0.0
  %369 = vmatprep.subr.mxu0 0.0
  %370 = vmatpush1.msra.mxu0 0.0
  %371 = vmatprep.subr.mxu0 0.0
  %372 = vmatpush1.msra.mxu0 0.0
  %373 = vmatprep.subr.mxu0 0.0
  %374 = vmatpush1.msra.mxu0 0.0
  %375 = vmatprep.subr.mxu0 0.0
  %376 = vmatpush1.msra.mxu0 0.0
  %377 = vmatprep.subr.mxu0 0.0
  %378 = vmatpush1.msra.mxu0 0.0
  %379 = vmatprep.subr.mxu0 0.0
  %380 = vmatpush1.msra.mxu0 0.0
  %381 = vmatprep.subr.mxu0 0.0
  %382 = vmatpush1.msra.mxu0 0.0
  %383 = vmatprep.subr.mxu0 0.0
  %384 = vmatpush1.msra.mxu0 0.0
  %385 = vmatprep.subr.mxu0 0.0
  %386 = vmatpush1.msra.mxu0 0.0
  %387 = vmatprep.subr.mxu0 0.0
  %388 = vmatpush1.msra.mxu0 0.0
  %389 = vmatprep.subr.mxu0 0.0
  %390 = vmatpush1.msra.mxu0 0.0
  %391 = vmatprep.subr.mxu0 0.0
  %392 = vmatpush1.msra.mxu0 0.0
  %393 = vmatprep.subr.mxu0 0.0
  %394 = vmatpush1.msra.mxu0 0.0
  %395 = vmatprep.subr.mxu0 0.0
  %396 = vmatpush1.msra.mxu0 0.0
  %397 = vmatprep.subr.mxu0 0.0
  %398 = vmatpush1.msra.mxu0 0.0
  %399 = vmatprep.subr.mxu0 0.0
  %400 = vmatpush1.msra.mxu0 0.0
  %401 = vmatprep.subr.mxu0 0.0
  %402 = vmatpush1.msra.mxu0 0.0
  %403 = vmatprep.subr.mxu0 0.0
  %404 = vmatpush1.msra.mxu0 0.0
  %405 = vmatprep.subr.mxu0 0.0
  %406 = vmatpush1.msra.mxu0 0.0
  %407 = vmatprep.subr.mxu0 0.0
  %408 = vmatpush1.msra.mxu0 0.0
  %409 = vmatprep.subr.mxu0 0.0
  %410 = vmatpush1.msra.mxu0 0.0
  %411 = vmatprep.subr.mxu0 0.0
  %412 = vmatpush1.msra.mxu0 0.0
  %413 = vmatprep.subr.mxu0 0.0
  %414 = vmatpush1.msra.mxu0 0.0
  %415 = vmatprep.subr.mxu0 0.0
  %416 = vmatpush1.msra.mxu0 0.0
  %417 = vmatprep.subr.mxu0 0.0
  %418 = vmatpush1.msra.mxu0 0.0
  %419 = vmatprep.mubr.f32.mxu0 0.0
  %420 = vmatmul.mubr.f32.gmra.mrb[0].mxu0 %v353
  %v421 = vpop.f32.mrb[0].mxu0
  %v422 = vadd.f32 %v350, %v421
  %v423 = vpop.f32.mrb[0].mxu0
  %424 = vdwg.mxu0
  %v425 = vtanh.pop %v422
  %vm426 = vcmask 15360
  %427 = vst.msk [vmem:[%s3] sm:$0xff] %vm426, %v425
  // Predicated region
  $region14: #{tpu_custom_call.1} parent=0 // pred_check
    _
  $region15: #{tpu_custom_call.1} parent=0 // pred_check_branch
    %429 = sbr.rel (0) target = $region17
  $region16: #{tpu_custom_call.1} parent=0 // pred_region
    _
  $region17: #{tpu_custom_call.1} parent=0 // pred_fallthru
    _
  // Predicated region
  $region18: #{tpu_custom_call.1} parent=0 // pred_check
    _
  $region19: #{tpu_custom_call.1} parent=0 // pred_check_branch
    %431 = sbr.rel (0) target = $region21
  $region20: #{tpu_custom_call.1} parent=0 // pred_region
    _
  $region21: #{tpu_custom_call.1} parent=0 // pred_fallthru
    _

</llo_original>
